<compile_context>
chip_gen: v7x
topology: tpu7x:2x2x1
jax: 0.10.0
libtpu: 0.0.40
codegen_flags: <defaults>
</compile_context>

<pallas_src>
import functools
import math

import jax
import jax.numpy as jnp
from jax.experimental import pallas as pl
from jax.experimental.pallas import tpu as pltpu


def _make_divisible(v, divisor, min_value=None):
    if min_value is None:
        min_value = divisor
    new_v = max(min_value, int(v + divisor / 2) // divisor * divisor)
    if new_v < 0.9 * v:
        new_v += divisor
    return new_v


def _se_kernel(x_ref, w1_ref, b1_ref, w2_ref, b2_ref, o_ref, *, inv_hw):
    # x_ref: (TB, C, HW_pad) block covering TB batch elements.
    x = x_ref[...]

    # ---- squeeze: global average pool over the (padded) spatial axis.
    # The pad region is zeros so the sum is exact; divide by the true H*W.
    pooled = jnp.sum(x.astype(jnp.float32), axis=-1) * inv_hw          # (TB, C)

    # ---- excitation: Linear -> ReLU -> Linear -> h_sigmoid, batched over TB.
    h = jnp.dot(pooled, w1_ref[...], preferred_element_type=jnp.float32)
    h = jnp.maximum(h + b1_ref[...], 0.0)                              # (TB, hidden)
    s = jnp.dot(h, w2_ref[...], preferred_element_type=jnp.float32) + b2_ref[...]
    s = jnp.clip(s + 3.0, 0.0, 6.0) * (1.0 / 6.0)                      # (TB, C)

    # ---- scale: broadcast the per-(batch, channel) scale over spatial.
    o_ref[...] = x * s.astype(x.dtype)[:, :, None]


def _choose_tb(batch, c, hw_pad, itemsize, vmem_budget_bytes=8 << 20, tb_cap=8):
    """Largest divisor of `batch` whose x blocks (input + output, each
    double-buffered by the pipeline) fit a conservative VMEM budget."""
    per_elem = c * hw_pad * itemsize
    max_tb = max(1, vmem_budget_bytes // (4 * per_elem))
    max_tb = int(min(max_tb, tb_cap, batch))
    for tb in range(max_tb, 0, -1):
        if batch % tb == 0:
            return tb
    return 1


def se_layer(x, w1, b1, w2, b2):
    """x: (B, C, H, W). Returns x * h_sigmoid(FC2(relu(FC1(avgpool(x)))))."""
    B, C, H, W = x.shape
    HW = H * W
    HW_pad = int(math.ceil(HW / 128)) * 128
    hidden = w1.shape[1]

    x3 = x.reshape(B, C, HW)
    if HW_pad != HW:
        # Zero padding keeps the pooled sum exact (divisor stays the true HW)
        # and makes the output lane dimension 128-dense.
        x3 = jnp.pad(x3, ((0, 0), (0, 0), (0, HW_pad - HW)))

    tb = _choose_tb(B, C, HW_pad, x.dtype.itemsize)

    kernel = functools.partial(_se_kernel, inv_hw=1.0 / HW)

    out = pl.pallas_call(
        kernel,
        out_shape=jax.ShapeDtypeStruct((B, C, HW_pad), x.dtype),
        grid_spec=pltpu.PrefetchScalarGridSpec(
            num_scalar_prefetch=0,
            grid=(B // tb,),
            in_specs=[
                pl.BlockSpec((tb, C, HW_pad), lambda b: (b, 0, 0)),  # x slab
                pl.BlockSpec((C, hidden), lambda b: (0, 0)),         # W1
                pl.BlockSpec((1, hidden), lambda b: (0, 0)),         # b1
                pl.BlockSpec((hidden, C), lambda b: (0, 0)),         # W2
                pl.BlockSpec((1, C), lambda b: (0, 0)),              # b2
            ],
            out_specs=pl.BlockSpec((tb, C, HW_pad), lambda b: (b, 0, 0)),
        ),
        compiler_params=pltpu.CompilerParams(
            dimension_semantics=("parallel",),
            vmem_limit_bytes=32 * 1024 * 1024,
        ),
    )(x3, w1, b1, w2, b2)

    out = out[:, :, :HW].reshape(B, C, H, W)
    return out


def se_layer_ref(x, w1, b1, w2, b2):
    """Pure-JAX reference matching the PyTorch SELayer forward."""
    B, C, H, W = x.shape
    y = jnp.mean(x, axis=(2, 3))                     # (B, C)
    y = jnp.maximum(y @ w1 + b1[0], 0.0)             # (B, hidden)
    y = y @ w2 + b2[0]                               # (B, C)
    y = jnp.clip(y + 3.0, 0.0, 6.0) / 6.0            # h_sigmoid
    return x * y[:, :, None, None]


if __name__ == "__main__":
    # Small shapes consistent with the module: batch=2, channels=4, spatial=16
    B, C, H, W = 2, 4, 16, 16
    reduction = 4
    hidden = _make_divisible(C // reduction, 8)      # = 8

    key = jax.random.PRNGKey(0)
    kx, k1, kb1, k2, kb2 = jax.random.split(key, 5)

    x = jax.random.normal(kx, (B, C, H, W), dtype=jnp.float32)
    # Linear(channel -> hidden): torch weight is (hidden, C); we store it transposed.
    w1 = jax.random.normal(k1, (C, hidden), dtype=jnp.float32) * 0.1
    b1 = jax.random.normal(kb1, (1, hidden), dtype=jnp.float32) * 0.1
    # Linear(hidden -> channel)
    w2 = jax.random.normal(k2, (hidden, C), dtype=jnp.float32) * 0.1
    b2 = jax.random.normal(kb2, (1, C), dtype=jnp.float32) * 0.1

    out = se_layer(x, w1, b1, w2, b2)
    out = jax.block_until_ready(out)

    ref = se_layer_ref(x, w1, b1, w2, b2)
    assert out.shape == (B, C, H, W)
    assert jnp.allclose(out, ref, atol=1e-5, rtol=1e-5), "mismatch vs reference"

    print("KERNEL_OK")
</pallas_src>

<mosaic_0001>
module attributes {stable_mosaic.version = 11 : i64} {
  func.func @_se_kernel(%arg0: i32, %arg1: memref<2x4x256xf32, #tpu.memory_space<vmem>>, %arg2: memref<4x8xf32, #tpu.memory_space<vmem>>, %arg3: memref<1x8xf32, #tpu.memory_space<vmem>>, %arg4: memref<8x4xf32, #tpu.memory_space<vmem>>, %arg5: memref<1x4xf32, #tpu.memory_space<vmem>>, %arg6: memref<2x4x256xf32, #tpu.memory_space<vmem>>) attributes {dimension_semantics = [#tpu.dimension_semantics<parallel>], iteration_bounds = array<i64: 1>, scalar_prefetch = 0 : i64, scratch_operands = 0 : i64, tpu.core_type = #tpu.core_type<tc>, window_params = [{transform_indices = @transform_0, window_bounds = array<i64: 2, 4, 256>}, {pipeline_mode = #tpu.pipeline_mode<synchronous>, transform_indices = @transform_1, window_bounds = array<i64: 4, 8>}, {pipeline_mode = #tpu.pipeline_mode<synchronous>, transform_indices = @transform_2, window_bounds = array<i64: 1, 8>}, {pipeline_mode = #tpu.pipeline_mode<synchronous>, transform_indices = @transform_3, window_bounds = array<i64: 8, 4>}, {pipeline_mode = #tpu.pipeline_mode<synchronous>, transform_indices = @transform_4, window_bounds = array<i64: 1, 4>}, {transform_indices = @transform_5, window_bounds = array<i64: 2, 4, 256>}]} {
    %c0 = arith.constant 0 : index
    %c0_0 = arith.constant 0 : index
    %c0_1 = arith.constant 0 : index
    %0 = vector.load %arg1[%c0, %c0_0, %c0_1] : memref<2x4x256xf32, #tpu.memory_space<vmem>>, vector<2x4x256xf32>
    %cst = arith.constant dense<0.000000e+00> : vector<2x4xf32>
    %1 = vector.multi_reduction <add>, %0, %cst [2] : vector<2x4x256xf32> to vector<2x4xf32>
    %cst_2 = arith.constant 3.906250e-03 : f32
    %2 = vector.broadcast %cst_2 : f32 to vector<2x4xf32>
    %3 = arith.mulf %1, %2 : vector<2x4xf32>
    %c0_3 = arith.constant 0 : index
    %c0_4 = arith.constant 0 : index
    %4 = vector.load %arg2[%c0_3, %c0_4] : memref<4x8xf32, #tpu.memory_space<vmem>>, vector<4x8xf32>
    %cst_5 = arith.constant dense<0.000000e+00> : vector<2x8xf32>
    %5 = tpu.matmul %3, %4, %cst_5 {dimension_numbers = #tpu.dot_dimension_numbers<[1], [0], [0], [1], [0, 0, 1, 1], [], []>} : vector<2x4xf32>, vector<4x8xf32>, vector<2x8xf32> -> vector<2x8xf32>
    %c0_6 = arith.constant 0 : index
    %c0_7 = arith.constant 0 : index
    %6 = vector.load %arg3[%c0_6, %c0_7] : memref<1x8xf32, #tpu.memory_space<vmem>>, vector<1x8xf32>
    %7 = vector.broadcast %6 : vector<1x8xf32> to vector<2x8xf32>
    %8 = arith.addf %5, %7 : vector<2x8xf32>
    %cst_8 = arith.constant 0.000000e+00 : f32
    %9 = vector.broadcast %cst_8 : f32 to vector<2x8xf32>
    %10 = arith.maximumf %8, %9 : vector<2x8xf32>
    %c0_9 = arith.constant 0 : index
    %c0_10 = arith.constant 0 : index
    %11 = vector.load %arg4[%c0_9, %c0_10] : memref<8x4xf32, #tpu.memory_space<vmem>>, vector<8x4xf32>
    %cst_11 = arith.constant dense<0.000000e+00> : vector<2x4xf32>
    %12 = tpu.matmul %10, %11, %cst_11 {dimension_numbers = #tpu.dot_dimension_numbers<[1], [0], [0], [1], [0, 0, 1, 1], [], []>} : vector<2x8xf32>, vector<8x4xf32>, vector<2x4xf32> -> vector<2x4xf32>
    %c0_12 = arith.constant 0 : index
    %c0_13 = arith.constant 0 : index
    %13 = vector.load %arg5[%c0_12, %c0_13] : memref<1x4xf32, #tpu.memory_space<vmem>>, vector<1x4xf32>
    %14 = vector.broadcast %13 : vector<1x4xf32> to vector<2x4xf32>
    %15 = arith.addf %12, %14 : vector<2x4xf32>
    %cst_14 = arith.constant 3.000000e+00 : f32
    %16 = vector.broadcast %cst_14 : f32 to vector<2x4xf32>
    %17 = arith.addf %15, %16 : vector<2x4xf32>
    %cst_15 = arith.constant 0.000000e+00 : f32
    %cst_16 = arith.constant 6.000000e+00 : f32
    %18 = vector.broadcast %cst_15 : f32 to vector<2x4xf32>
    %19 = arith.maximumf %18, %17 : vector<2x4xf32>
    %20 = vector.broadcast %cst_16 : f32 to vector<2x4xf32>
    %21 = arith.minimumf %20, %19 : vector<2x4xf32>
    %cst_17 = arith.constant 0.166666672 : f32
    %22 = vector.broadcast %cst_17 : f32 to vector<2x4xf32>
    %23 = arith.mulf %21, %22 : vector<2x4xf32>
    %24 = vector.shape_cast %23 : vector<2x4xf32> to vector<2x4x1xf32>
    %25 = vector.broadcast %24 : vector<2x4x1xf32> to vector<2x4x256xf32>
    %26 = arith.mulf %0, %25 : vector<2x4x256xf32>
    %c0_18 = arith.constant 0 : index
    %c0_19 = arith.constant 0 : index
    %c0_20 = arith.constant 0 : index
    %27 = vector.load %arg6[%c0_18, %c0_19, %c0_20] : memref<2x4x256xf32, #tpu.memory_space<vmem>>, vector<2x4x256xf32>
    tpu.vector_store %arg6[%c0_18, %c0_19, %c0_20], %26 {strides = array<i32>} : memref<2x4x256xf32, #tpu.memory_space<vmem>>, vector<2x4x256xf32>,
    return
  }
  func.func @transform_0(%arg0: i32) -> (i32, i32, i32) {
    %c0_i32 = arith.constant 0 : i32
    %c0_i32_0 = arith.constant 0 : i32
    %c0_i32_1 = arith.constant 0 : i32
    return %arg0, %c0_i32, %c0_i32_0 : i32, i32, i32
  }
  func.func @transform_1(%arg0: i32) -> (i32, i32) {
    %c0_i32 = arith.constant 0 : i32
    %c0_i32_0 = arith.constant 0 : i32
    %c0_i32_1 = arith.constant 0 : i32
    return %c0_i32, %c0_i32_0 : i32, i32
  }
  func.func @transform_2(%arg0: i32) -> (i32, i32) {
    %c0_i32 = arith.constant 0 : i32
    %c0_i32_0 = arith.constant 0 : i32
    %c0_i32_1 = arith.constant 0 : i32
    return %c0_i32, %c0_i32_0 : i32, i32
  }
  func.func @transform_3(%arg0: i32) -> (i32, i32) {
    %c0_i32 = arith.constant 0 : i32
    %c0_i32_0 = arith.constant 0 : i32
    %c0_i32_1 = arith.constant 0 : i32
    return %c0_i32, %c0_i32_0 : i32, i32
  }
  func.func @transform_4(%arg0: i32) -> (i32, i32) {
    %c0_i32 = arith.constant 0 : i32
    %c0_i32_0 = arith.constant 0 : i32
    %c0_i32_1 = arith.constant 0 : i32
    return %c0_i32, %c0_i32_0 : i32, i32
  }
  func.func @transform_5(%arg0: i32) -> (i32, i32, i32) {
    %c0_i32 = arith.constant 0 : i32
    %c0_i32_0 = arith.constant 0 : i32
    %c0_i32_1 = arith.constant 0 : i32
    return %arg0, %c0_i32, %c0_i32_0 : i32, i32, i32
  }
}

</mosaic_0001>

<llo_original>
// kernel: tpu_custom_call.1
$region0: #{tpu_custom_call.1}
  #allocation0 [shape = 'u32[]', space=smem, size = 0x4, offset = 0x4, fixed_abs, tag = 'smem constant byte address 0x4 - core index']
  #allocation1 [shape = 'u32[144,128]{1,0:T(1,128)}', space=vmem, size = 0x12000, scoped, tag = 'internal scratch']
  %s0 = inlined_call_operand.hbm [shape: f32[2,4,256], index: 0, kind: input, shape index: {}]
  %s1 = inlined_call_operand.vmem [shape: f32[4,8], index: 1, kind: input, shape index: {}]
  %s2 = inlined_call_operand.vmem [shape: f32[1,8], index: 2, kind: input, shape index: {}]
  %s3 = inlined_call_operand.vmem [shape: f32[8,4], index: 3, kind: input, shape index: {}]
  %s4 = inlined_call_operand.vmem [shape: f32[1,4], index: 4, kind: input, shape index: {}]
  %s5 = inlined_call_operand.hbm [shape: f32[2,4,256], index: 5, kind: output, shape index: {}]
  %s6 = sld [smem:[#allocation0]]
  $region34: #{tpu_custom_call.1} parent=0
    _
  %s8 = ssub.s32 1, %s6
  %s9 = scalar_select 0, %s8, %s6
  $region1: #{tpu_custom_call.1} parent=0
    #allocation2 [shape = 'u8[8192]{0}', space=vmem, size = 0x2000, scoped, tag = 'input window, operand 0, single buffered']
    #allocation3 [shape = 's32[1]{0}', space=sflag, size = 0x4, scoped, tag = 'scoped memory for tpu_custom_call.1']
    #allocation4 [shape = 's32[1]{0}', space=sflag, size = 0x4, scoped, tag = 'scoped memory for tpu_custom_call.1']
    #allocation5 [shape = 'u8[8192]{0}', space=vmem, size = 0x2000, scoped, tag = 'output window, operand 0, single buffered']
    %10 = vsyncpa [#allocation3], 0
    %11 = vsyncpa [#allocation4], 0
    // Predicated region
    $region2: #{tpu_custom_call.1} parent=1 // pred_check
      _
    $region3: #{tpu_custom_call.1} parent=1 // pred_check_branch
      %13 = sbr.rel (0) target = $region5
    $region4: #{tpu_custom_call.1} parent=1 // pred_region
      %s15 = ssub.s32 256, 256
      %16 = vsyncadd [#allocation3], %s15
      %s17 = sshll.u32 [#allocation2], 4
      %s18 = int_to_ptr.vmem [resolvable:$true] %s17
      %23 = dma.hbm_to_vmem [thread:$0]  %s0, 256, %s18, [#allocation3], 128, 128, 8
    $region5: #{tpu_custom_call.1} parent=1 // pred_fallthru
      _
    // Predicated region
    $region6: #{tpu_custom_call.1} parent=1 // pred_check
      _
    $region7: #{tpu_custom_call.1} parent=1 // pred_check_branch
      %25 = sbr.rel (0) target = $region9
    $region8: #{tpu_custom_call.1} parent=1 // pred_region
      _
    $region9: #{tpu_custom_call.1} parent=1 // pred_fallthru
      _
    // Predicated region
    $region10: #{tpu_custom_call.1} parent=1 // pred_check
      _
    $region11: #{tpu_custom_call.1} parent=1 // pred_check_branch
      %27 = sbr.rel (0) target = $region13
    $region12: #{tpu_custom_call.1} parent=1 // pred_region
      _
    $region13: #{tpu_custom_call.1} parent=1 // pred_fallthru
      _
    // Predicated region
    $region14: #{tpu_custom_call.1} parent=1 // pred_check
      _
    $region15: #{tpu_custom_call.1} parent=1 // pred_check_branch
      %29 = sbr.rel (0) target = $region17
    $region16: #{tpu_custom_call.1} parent=1 // pred_region
      _
    $region17: #{tpu_custom_call.1} parent=1 // pred_fallthru
      _
    // Predicated region
    $region18: #{tpu_custom_call.1} parent=1 // pred_check
      _
    $region19: #{tpu_custom_call.1} parent=1 // pred_check_branch
      %31 = sbr.rel (0) target = $region21
    $region20: #{tpu_custom_call.1} parent=1 // pred_region
      _
    $region21: #{tpu_custom_call.1} parent=1 // pred_fallthru
      _
    // Predicated region
    $region22: #{tpu_custom_call.1} parent=1 // pred_check
      _
    $region23: #{tpu_custom_call.1} parent=1 // pred_check_branch
      %33 = sbr.rel (0) target = $region25
    $region24: #{tpu_custom_call.1} parent=1 // pred_region
      %34 = dma.done [#allocation3], 256
    $region25: #{tpu_custom_call.1} parent=1 // pred_fallthru
      _
    %v35 = vld [vmem:[#allocation2] sm:$0xff]
    %v36 = vld [vmem:[#allocation2 + $0x8] sm:$0xff]
    %v39 = vcombine.high %v35, %v35
    %v40 = vcombine.high %v36, %v36
    %vm43 = vcmask 1043456
    %v44 = vsel %vm43, %v35, 0.0
    %v45 = vsel %vm43, %v39, 0.0
    %v46 = vadd.f32 %v44, %v45
    %47 = vadd.xlane.f32.xlu0 %v46
    %v48 = vpop.xlane.xlu0 %47
    %v49 = vsel %vm43, %v36, 0.0
    %v50 = vsel %vm43, %v40, 0.0
    %v51 = vadd.f32 %v49, %v50
    %52 = vadd.xlane.f32.xlu0 %v51
    %v53 = vpop.xlane.xlu0 %52
    %v54 = vmul.f32 %v48, 0.00390625
    %v55 = vmul.f32 %v53, 0.00390625
    %v56 = vld [vmem:[%s1] sm:$0xf]
    %v57 = vld [vmem:[%s2] sm:$0x1]
    %v59 = vlaneseq
    %v60 = vshrl.u32 %v59, 7
    %v61 = vsub.s32 0, %v60
    %v62 = vrot.slane %v57, %v61
    %v66 = vlaneseq
    %v67 = vand.u32 %v66, 127
    %v68 = vlaneseq
    %v69 = vshrl.u32 %v68, 7
    %v70 = vsub.s32 %v67, %v69
    %v71 = vrot.slane %v54, %v70
    %v72 = vlaneseq
    %v73 = vshrl.u32 %v72, 7
    %v74 = vsub.s32 %v67, %v73
    %v75 = vrot.slane %v55, %v74
    %vm76 = vcmask 1041409
    %v77 = vsel %vm76, %v75, %v71
    %vm78 = vcmask 31744
    %v79 = vsel %vm78, %v77, 0
    %v82 = vsel %vm43, %v56, 0
    %84 = vmatprep.subr.mxu0 0.0
    %85 = vmatpush1.msra.mxu0 %v82
    %86 = vmatprep.subr.mxu0 0.0
    %87 = vmatpush1.msra.mxu0 0.0
    %88 = vmatprep.subr.mxu0 0.0
    %89 = vmatpush1.msra.mxu0 0.0
    %90 = vmatprep.subr.mxu0 0.0
    %91 = vmatpush1.msra.mxu0 0.0
    %92 = vmatprep.subr.mxu0 0.0
    %93 = vmatpush1.msra.mxu0 0.0
    %94 = vmatprep.subr.mxu0 0.0
    %95 = vmatpush1.msra.mxu0 0.0
    %96 = vmatprep.subr.mxu0 0.0
    %97 = vmatpush1.msra.mxu0 0.0
    %98 = vmatprep.subr.mxu0 0.0
    %99 = vmatpush1.msra.mxu0 0.0
    %100 = vmatprep.subr.mxu0 0.0
    %101 = vmatpush1.msra.mxu0 0.0
    %102 = vmatprep.subr.mxu0 0.0
    %103 = vmatpush1.msra.mxu0 0.0
    %104 = vmatprep.subr.mxu0 0.0
    %105 = vmatpush1.msra.mxu0 0.0
    %106 = vmatprep.subr.mxu0 0.0
    %107 = vmatpush1.msra.mxu0 0.0
    %108 = vmatprep.subr.mxu0 0.0
    %109 = vmatpush1.msra.mxu0 0.0
    %110 = vmatprep.subr.mxu0 0.0
    %111 = vmatpush1.msra.mxu0 0.0
    %112 = vmatprep.subr.mxu0 0.0
    %113 = vmatpush1.msra.mxu0 0.0
    %114 = vmatprep.subr.mxu0 0.0
    %115 = vmatpush1.msra.mxu0 0.0
    %116 = vmatprep.subr.mxu0 0.0
    %117 = vmatpush1.msra.mxu0 0.0
    %118 = vmatprep.subr.mxu0 0.0
    %119 = vmatpush1.msra.mxu0 0.0
    %120 = vmatprep.subr.mxu0 0.0
    %121 = vmatpush1.msra.mxu0 0.0
    %122 = vmatprep.subr.mxu0 0.0
    %123 = vmatpush1.msra.mxu0 0.0
    %124 = vmatprep.subr.mxu0 0.0
    %125 = vmatpush1.msra.mxu0 0.0
    %126 = vmatprep.subr.mxu0 0.0
    %127 = vmatpush1.msra.mxu0 0.0
    %128 = vmatprep.subr.mxu0 0.0
    %129 = vmatpush1.msra.mxu0 0.0
    %130 = vmatprep.subr.mxu0 0.0
    %131 = vmatpush1.msra.mxu0 0.0
    %132 = vmatprep.subr.mxu0 0.0
    %133 = vmatpush1.msra.mxu0 0.0
    %134 = vmatprep.subr.mxu0 0.0
    %135 = vmatpush1.msra.mxu0 0.0
    %136 = vmatprep.subr.mxu0 0.0
    %137 = vmatpush1.msra.mxu0 0.0
    %138 = vmatprep.subr.mxu0 0.0
    %139 = vmatpush1.msra.mxu0 0.0
    %140 = vmatprep.subr.mxu0 0.0
    %141 = vmatpush1.msra.mxu0 0.0
    %142 = vmatprep.subr.mxu0 0.0
    %143 = vmatpush1.msra.mxu0 0.0
    %144 = vmatprep.subr.mxu0 0.0
    %145 = vmatpush1.msra.mxu0 0.0
    %146 = vmatprep.subr.mxu0 0.0
    %147 = vmatpush1.msra.mxu0 0.0
    %148 = vmatprep.mubr.f32.mxu0 0.0
    %149 = vmatmul.mubr.f32.gmra.mrb[0].mxu0 %v79
    %v150 = vpop.f32.mrb[0].mxu0
    %v151 = vadd.f32 %v62, %v150
    %v152 = vpop.f32.mrb[0].mxu0
    %153 = vdwg.mxu0
    %v154 = vmax.f32 %v151, 0.0
    %v155 = vld [vmem:[%s3] sm:$0xff]
    %v156 = vld [vmem:[%s4] sm:$0x1]
    %v158 = vlaneseq
    %v159 = vshrl.u32 %v158, 7
    %v160 = vsub.s32 0, %v159
    %v161 = vrot.slane %v156, %v160
    %vm163 = vcmask 64512
    %v165 = vsel %vm163, %v154, 0
    %167 = vmatprep.subr.mxu0 0.0
    %168 = vmatpush1.msra.mxu0 %v155
    %169 = vmatprep.subr.mxu0 0.0
    %170 = vmatpush1.msra.mxu0 0.0
    %171 = vmatprep.subr.mxu0 0.0
    %172 = vmatpush1.msra.mxu0 0.0
    %173 = vmatprep.subr.mxu0 0.0
    %174 = vmatpush1.msra.mxu0 0.0
    %175 = vmatprep.subr.mxu0 0.0
    %176 = vmatpush1.msra.mxu0 0.0
    %177 = vmatprep.subr.mxu0 0.0
    %178 = vmatpush1.msra.mxu0 0.0
    %179 = vmatprep.subr.mxu0 0.0
    %180 = vmatpush1.msra.mxu0 0.0
    %181 = vmatprep.subr.mxu0 0.0
    %182 = vmatpush1.msra.mxu0 0.0
    %183 = vmatprep.subr.mxu0 0.0
    %184 = vmatpush1.msra.mxu0 0.0
    %185 = vmatprep.subr.mxu0 0.0
    %186 = vmatpush1.msra.mxu0 0.0
    %187 = vmatprep.subr.mxu0 0.0
    %188 = vmatpush1.msra.mxu0 0.0
    %189 = vmatprep.subr.mxu0 0.0
    %190 = vmatpush1.msra.mxu0 0.0
    %191 = vmatprep.subr.mxu0 0.0
    %192 = vmatpush1.msra.mxu0 0.0
    %193 = vmatprep.subr.mxu0 0.0
    %194 = vmatpush1.msra.mxu0 0.0
    %195 = vmatprep.subr.mxu0 0.0
    %196 = vmatpush1.msra.mxu0 0.0
    %197 = vmatprep.subr.mxu0 0.0
    %198 = vmatpush1.msra.mxu0 0.0
    %199 = vmatprep.subr.mxu0 0.0
    %200 = vmatpush1.msra.mxu0 0.0
    %201 = vmatprep.subr.mxu0 0.0
    %202 = vmatpush1.msra.mxu0 0.0
    %203 = vmatprep.subr.mxu0 0.0
    %204 = vmatpush1.msra.mxu0 0.0
    %205 = vmatprep.subr.mxu0 0.0
    %206 = vmatpush1.msra.mxu0 0.0
    %207 = vmatprep.subr.mxu0 0.0
    %208 = vmatpush1.msra.mxu0 0.0
    %209 = vmatprep.subr.mxu0 0.0
    %210 = vmatpush1.msra.mxu0 0.0
    %211 = vmatprep.subr.mxu0 0.0
    %212 = vmatpush1.msra.mxu0 0.0
    %213 = vmatprep.subr.mxu0 0.0
    %214 = vmatpush1.msra.mxu0 0.0
    %215 = vmatprep.subr.mxu0 0.0
    %216 = vmatpush1.msra.mxu0 0.0
    %217 = vmatprep.subr.mxu0 0.0
    %218 = vmatpush1.msra.mxu0 0.0
    %219 = vmatprep.subr.mxu0 0.0
    %220 = vmatpush1.msra.mxu0 0.0
    %221 = vmatprep.subr.mxu0 0.0
    %222 = vmatpush1.msra.mxu0 0.0
    %223 = vmatprep.subr.mxu0 0.0
    %224 = vmatpush1.msra.mxu0 0.0
    %225 = vmatprep.subr.mxu0 0.0
    %226 = vmatpush1.msra.mxu0 0.0
    %227 = vmatprep.subr.mxu0 0.0
    %228 = vmatpush1.msra.mxu0 0.0
    %229 = vmatprep.subr.mxu0 0.0
    %230 = vmatpush1.msra.mxu0 0.0
    %231 = vmatprep.mubr.f32.mxu0 0.0
    %232 = vmatmul.mubr.f32.gmra.mrb[0].mxu0 %v165
    %v233 = vpop.f32.mrb[0].mxu0
    %v234 = vadd.f32 %v161, %v233
    %v235 = vpop.f32.mrb[0].mxu0
    %236 = vdwg.mxu0
    %v237 = vadd.f32 %v234, 3.0
    %v238 = vmax.f32 %v237, 0.0
    %v239 = vmin.f32 %v238, 6.0
    %v240 = vmul.f32 %v239, 0.16666667
    %v241 = vlaneseq
    %v242 = vshrl.u32 %v241, 7
    %v243 = vsub.s32 0, %v242
    %v244 = vrot.slane %v240, %v243
    %246 = vbcast.lane.b32.xlu0 %v244, 256
    %v247 = vpop.permute.xlu0 %246
    %v248 = vlaneseq
    %v249 = vshrl.u32 %v248, 7
    %v250 = vsub.s32 1, %v249
    %v251 = vrot.slane %v240, %v250
    %253 = vbcast.lane.b32.xlu0 %v251, 256
    %v254 = vpop.permute.xlu0 %253
    %v258 = vunpack.c.l.s4 839922192
    %v259 = vunpack.c.0.s8 %v258
    %v260 = vlaneseq
    %v261 = vshrl.u32 %v260, 7
    %v262 = vsub.s32 %v259, %v261
    %v263 = vrot.slane %v247, %v262
    %v265 = vunpack.c.l.s4 839922192
    %v266 = vunpack.c.0.s8 %v265
    %v267 = vlaneseq
    %v268 = vshrl.u32 %v267, 7
    %v269 = vsub.s32 %v266, %v268
    %v270 = vrot.slane %v254, %v269
    %v273 = vmul.f32 %v35, %v263
    %v274 = vmul.f32 %v36, %v270
    %275 = vst [vmem:[#allocation5] sm:$0xff] %v273
    %276 = vst [vmem:[#allocation5 + $0x8] sm:$0xff] %v274
    // Predicated region
    $region26: #{tpu_custom_call.1} parent=1 // pred_check
      _
    $region27: #{tpu_custom_call.1} parent=1 // pred_check_branch
      %278 = sbr.rel (0) target = $region29
    $region28: #{tpu_custom_call.1} parent=1 // pred_region
      %s280 = ssub.s32 256, 256
      %281 = vsyncadd [#allocation4], %s280
      %s282 = sshll.u32 [#allocation5], 4
      %s283 = int_to_ptr.vmem [resolvable:$true] %s282
      %288 = dma.vmem_to_hbm [thread:$0]  %s283, 256, %s5, [#allocation4], 128, 128, 8
    $region29: #{tpu_custom_call.1} parent=1 // pred_fallthru
      _
    // Predicated region
    $region30: #{tpu_custom_call.1} parent=1 // pred_check
      _
    $region31: #{tpu_custom_call.1} parent=1 // pred_check_branch
      %290 = sbr.rel (0) target = $region33
    $region32: #{tpu_custom_call.1} parent=1 // pred_region
      %291 = dma.done [#allocation4], 256
    $region33: #{tpu_custom_call.1} parent=1 // pred_fallthru
      _
    %292 = vsyncpa [#allocation3], 1
    %293 = vsyncpa [#allocation4], 1

</llo_original>
